<compile_context>
chip_gen: v7x
topology: tpu7x:2x2x1
jax: 0.10.0
libtpu: 0.0.40
codegen_flags: <defaults>
</compile_context>

<pallas_src>
import jax
import jax.numpy as jnp
from jax import lax
from jax.experimental import pallas as pl
from jax.experimental.pallas import tpu as pltpu


def _round_up(x, m):
    return -(-x // m) * m


# --------------------------------------------------------------------------
# single_kernel path: one GEMM, classes batched into M
#   bt_ref : (C_p, tk)   betas^T tile (classes x contraction)
#   kt_ref : (tn, tk)    k_test tile  (test rows x contraction)
#   o_ref  : (C_p, tn)   lane-dense output tile
# --------------------------------------------------------------------------
def _pred_gemm_kernel(bt_ref, kt_ref, o_ref, acc_ref):
    @pl.when(pl.program_id(1) == 0)
    def _init():
        acc_ref[...] = jnp.zeros_like(acc_ref)

    acc_ref[...] += lax.dot_general(
        bt_ref[...], kt_ref[...],
        dimension_numbers=(((1,), (1,)), ((), ())),
        preferred_element_type=jnp.float32,
    )

    @pl.when(pl.program_id(1) == pl.num_programs(1) - 1)
    def _finalize():
        o_ref[...] = acc_ref[...]


# --------------------------------------------------------------------------
# multi-kernel path (K == n_class): per-class mat-vec, tiled over n_test/n_train
#   b_ref  : (1, 1, tk)   beta row for class i
#   kt_ref : (1, tn, tk)  k_test[i] tile
#   o_ref  : (1, 1, tn)   lane-dense output tile
# --------------------------------------------------------------------------
def _pred_bmv_kernel(b_ref, kt_ref, o_ref, acc_ref):
    @pl.when(pl.program_id(2) == 0)
    def _init():
        acc_ref[...] = jnp.zeros_like(acc_ref)

    res = lax.dot_general(
        b_ref[0], kt_ref[0],
        dimension_numbers=(((1,), (1,)), ((), ())),
        preferred_element_type=jnp.float32,
    )  # (1, tn)
    acc_ref[...] += res[None]

    @pl.when(pl.program_id(2) == pl.num_programs(2) - 1)
    def _finalize():
        o_ref[...] = acc_ref[...]


def ntk_regression_forward(k_train, y, n_class, k_test, inv=None, reg=1e-6):
    """Pallas implementation of NTKRegression.forward.

    k_train: (K, n_train, n_train)   K == 1 => single_kernel
    y:       (n_train,) integer class labels
    k_test:  (K_test, n_test, n_train)
    returns: (n_test, n_class) float32
    """
    k_train = jnp.asarray(k_train, jnp.float32)
    k_test = jnp.asarray(k_test, jnp.float32)
    y = jnp.asarray(y)
    n_train = k_train.shape[1]
    n_test = k_test.shape[1]
    single_kernel = (k_train.shape[0] == 1)

    if not single_kernel:
        # guard against silently-OOB index maps (no runtime bounds check)
        assert k_train.shape[0] == n_class and k_test.shape[0] == n_class, (
            "multi-kernel case requires K == K_test == n_class")

    # one-hot labels, class axis leading: (n_class, n_train)
    classes = jnp.arange(n_class, dtype=y.dtype)
    y1h = (y[None, :] == classes[:, None]).astype(jnp.float32)

    # --- prologue (plain JAX): betas for all classes at once -------------
    if inv is not None:
        inv = jnp.asarray(inv, jnp.float32)
        if inv.ndim == 2:
            inv = inv[None]
        if inv.shape[0] == 1:
            betas = y1h @ inv[0].T                               # (C, n_train)
        else:
            betas = jnp.einsum('cjk,ck->cj', inv, y1h)           # (C, n_train)
    else:
        identity = jnp.eye(n_train, dtype=jnp.float32)[None]
        k_reg = k_train + identity * reg
        chol = jnp.linalg.cholesky(k_reg)                        # (K, n, n)
        if single_kernel:
            z = jax.scipy.linalg.solve_triangular(chol[0], y1h.T, lower=True)
            betas = jax.scipy.linalg.solve_triangular(
                chol[0], z, lower=True, trans=1).T               # (C, n_train)
        else:
            z = jax.scipy.linalg.solve_triangular(
                chol, y1h[:, :, None], lower=True)
            betas = jax.scipy.linalg.solve_triangular(
                chol, z, lower=True, trans=1)[..., 0]            # (C, n_train)

    # --- tiling (lane = 128 on contraction & n_test, capped for VMEM) ----
    C = n_class
    tn = min(512, _round_up(n_test, 128))
    tk = min(1024, _round_up(n_train, 128))
    n_test_p = _round_up(n_test, tn)
    n_train_p = _round_up(n_train, tk)

    betas_p = jnp.pad(betas, ((0, 0), (0, n_train_p - n_train)))

    if single_kernel:
        C_p = _round_up(C, 8)
        bt = jnp.pad(betas_p, ((0, C_p - C), (0, 0)))            # (C_p, n_train_p)
        kt = jnp.pad(k_test[0],
                     ((0, n_test_p - n_test), (0, n_train_p - n_train)))
        grid = (n_test_p // tn, n_train_p // tk)

        vmem_bytes = 4 * (2 * C_p * tk + 2 * tn * tk + 3 * C_p * tn) + (2 << 20)
        params = pltpu.CompilerParams(
            dimension_semantics=("parallel", "arbitrary"),
            vmem_limit_bytes=int(min(64 << 20, max(16 << 20, 2 * vmem_bytes))),
        )

        out = pl.pallas_call(
            _pred_gemm_kernel,
            out_shape=jax.ShapeDtypeStruct((C_p, n_test_p), jnp.float32),
            grid=grid,
            in_specs=[
                pl.BlockSpec((C_p, tk), lambda j, k: (0, k)),     # betas^T
                pl.BlockSpec((tn, tk), lambda j, k: (j, k)),      # k_test[0]
            ],
            out_specs=pl.BlockSpec((C_p, tn), lambda j, k: (0, j)),
            scratch_shapes=[pltpu.VMEM((C_p, tn), jnp.float32)],
            compiler_params=params,
        )(bt, kt)
        return out[:C, :n_test].T                                # (n_test, C)

    # --- multi-kernel case ------------------------------------------------
    kt = jnp.pad(k_test,
                 ((0, 0), (0, n_test_p - n_test), (0, n_train_p - n_train)))
    b3 = betas_p[:, None, :]                                     # (C, 1, n_train_p)
    grid = (C, n_test_p // tn, n_train_p // tk)

    vmem_bytes = 4 * (2 * tk + 2 * tn * tk + 3 * tn) + (2 << 20)
    params = pltpu.CompilerParams(
        dimension_semantics=("parallel", "parallel", "arbitrary"),
        vmem_limit_bytes=int(min(64 << 20, max(16 << 20, 2 * vmem_bytes))),
    )

    out = pl.pallas_call(
        _pred_bmv_kernel,
        out_shape=jax.ShapeDtypeStruct((C, 1, n_test_p), jnp.float32),
        grid=grid,
        in_specs=[
            pl.BlockSpec((1, 1, tk), lambda i, j, k: (i, 0, k)),   # betas[i]
            pl.BlockSpec((1, tn, tk), lambda i, j, k: (i, j, k)),  # k_test[i]
        ],
        out_specs=pl.BlockSpec((1, 1, tn), lambda i, j, k: (i, 0, j)),
        scratch_shapes=[pltpu.VMEM((1, 1, tn), jnp.float32)],
        compiler_params=params,
    )(b3, kt)
    return out[:, 0, :n_test].T                                  # (n_test, C)


if __name__ == "__main__":
    key = jax.random.PRNGKey(0)
    k1, k2, k3, k4, k5 = jax.random.split(key, 5)

    n_train, n_test, n_class = 64, 48, 4
    y = jax.random.randint(k3, (n_train,), 0, n_class, dtype=jnp.int32)
    y1h = (y[None, :] == jnp.arange(n_class, dtype=jnp.int32)[:, None]
           ).astype(jnp.float32)                                 # (C, n_train)
    eye = jnp.eye(n_train, dtype=jnp.float32)

    # ---------------- single-kernel case (K = 1) ----------------
    a = jax.random.normal(k1, (n_train, n_train), dtype=jnp.float32)
    k_train_s = (a @ a.T / n_train + 0.5 * eye)[None]            # PSD, well-conditioned
    k_test_s = jax.random.normal(k2, (1, n_test, n_train), dtype=jnp.float32)

    y_pred_s = jax.block_until_ready(
        ntk_regression_forward(k_train_s, y, n_class, k_test_s))
    assert y_pred_s.shape == (n_test, n_class)

    betas_ref = jnp.linalg.solve(k_train_s[0] + 1e-6 * eye, y1h.T)   # (n_train, C)
    ref_s = k_test_s[0] @ betas_ref                                  # (n_test, C)
    err_s = jnp.max(jnp.abs(y_pred_s - ref_s))
    assert jnp.allclose(y_pred_s, ref_s, atol=2e-3, rtol=2e-3), f"single max err {err_s}"

    # ---------------- multi-kernel case (K = n_class) ----------------
    b = jax.random.normal(k4, (n_class, n_train, n_train), dtype=jnp.float32)
    k_train_m = b @ jnp.swapaxes(b, -1, -2) / n_train + 0.5 * eye
    k_test_m = jax.random.normal(k5, (n_class, n_test, n_train), dtype=jnp.float32)

    y_pred_m = jax.block_until_ready(
        ntk_regression_forward(k_train_m, y, n_class, k_test_m))
    assert y_pred_m.shape == (n_test, n_class)

    betas_m = jnp.linalg.solve(k_train_m + 1e-6 * eye, y1h[:, :, None])[..., 0]
    ref_m = jnp.einsum('ctk,ck->tc', k_test_m, betas_m)
    err_m = jnp.max(jnp.abs(y_pred_m - ref_m))
    assert jnp.allclose(y_pred_m, ref_m, atol=2e-3, rtol=2e-3), f"multi max err {err_m}"

    print("KERNEL_OK")
</pallas_src>

<mosaic_0001>
module attributes {stable_mosaic.version = 11 : i64} {
  func.func @_pred_gemm_kernel(%arg0: i32, %arg1: i32, %arg2: memref<8x128xf32, #tpu.memory_space<vmem>>, %arg3: memref<128x128xf32, #tpu.memory_space<vmem>>, %arg4: memref<8x128xf32, #tpu.memory_space<vmem>>, %arg5: memref<8x128xf32, #tpu.memory_space<vmem>>) attributes {dimension_semantics = [#tpu.dimension_semantics<parallel>, #tpu.dimension_semantics<arbitrary>], iteration_bounds = array<i64: 1, 1>, scalar_prefetch = 0 : i64, scratch_operands = 1 : i64, tpu.core_type = #tpu.core_type<tc>, window_params = [{transform_indices = @transform_0, window_bounds = array<i64: 8, 128>}, {transform_indices = @transform_1, window_bounds = array<i64: 128, 128>}, {transform_indices = @transform_2, window_bounds = array<i64: 8, 128>}]} {
    %c0_i32 = arith.constant 0 : i32
    %0 = arith.cmpi eq, %arg1, %c0_i32 : i32
    %1 = arith.extui %0 : i1 to i32
    %c0_i32_0 = arith.constant 0 : i32
    %2 = arith.cmpi ne, %1, %c0_i32_0 : i32
    scf.if %2 {
      %cst_10 = arith.constant 0.000000e+00 : f32
      %12 = vector.broadcast %cst_10 : f32 to vector<8x128xf32>
      %c0_11 = arith.constant 0 : index
      %c0_12 = arith.constant 0 : index
      %13 = vector.load %arg5[%c0_11, %c0_12] : memref<8x128xf32, #tpu.memory_space<vmem>>, vector<8x128xf32>
      tpu.vector_store %arg5[%c0_11, %c0_12], %12 {strides = array<i32>} : memref<8x128xf32, #tpu.memory_space<vmem>>, vector<8x128xf32>,
    } else {
    }
    %c0 = arith.constant 0 : index
    %c0_1 = arith.constant 0 : index
    %3 = vector.load %arg5[%c0, %c0_1] : memref<8x128xf32, #tpu.memory_space<vmem>>, vector<8x128xf32>
    %c0_2 = arith.constant 0 : index
    %c0_3 = arith.constant 0 : index
    %4 = vector.load %arg2[%c0_2, %c0_3] : memref<8x128xf32, #tpu.memory_space<vmem>>, vector<8x128xf32>
    %c0_4 = arith.constant 0 : index
    %c0_5 = arith.constant 0 : index
    %5 = vector.load %arg3[%c0_4, %c0_5] : memref<128x128xf32, #tpu.memory_space<vmem>>, vector<128x128xf32>
    %cst = arith.constant dense<0.000000e+00> : vector<8x128xf32>
    %6 = tpu.matmul %4, %5, %cst {dimension_numbers = #tpu.dot_dimension_numbers<[1], [1], [0], [0], [0, 0, 1, 0], [], []>} : vector<8x128xf32>, vector<128x128xf32>, vector<8x128xf32> -> vector<8x128xf32>
    %7 = arith.addf %3, %6 : vector<8x128xf32>
    %c0_6 = arith.constant 0 : index
    %c0_7 = arith.constant 0 : index
    %8 = vector.load %arg5[%c0_6, %c0_7] : memref<8x128xf32, #tpu.memory_space<vmem>>, vector<8x128xf32>
    tpu.vector_store %arg5[%c0_6, %c0_7], %7 {strides = array<i32>} : memref<8x128xf32, #tpu.memory_space<vmem>>, vector<8x128xf32>,
    %c0_i32_8 = arith.constant 0 : i32
    %9 = arith.cmpi eq, %arg1, %c0_i32_8 : i32
    %10 = arith.extui %9 : i1 to i32
    %c0_i32_9 = arith.constant 0 : i32
    %11 = arith.cmpi ne, %10, %c0_i32_9 : i32
    scf.if %11 {
      %c0_10 = arith.constant 0 : index
      %c0_11 = arith.constant 0 : index
      %12 = vector.load %arg5[%c0_10, %c0_11] : memref<8x128xf32, #tpu.memory_space<vmem>>, vector<8x128xf32>
      %c0_12 = arith.constant 0 : index
      %c0_13 = arith.constant 0 : index
      %13 = vector.load %arg4[%c0_12, %c0_13] : memref<8x128xf32, #tpu.memory_space<vmem>>, vector<8x128xf32>
      tpu.vector_store %arg4[%c0_12, %c0_13], %12 {strides = array<i32>} : memref<8x128xf32, #tpu.memory_space<vmem>>, vector<8x128xf32>,
    } else {
    }
    return
  }
  func.func @transform_0(%arg0: i32, %arg1: i32) -> (i32, i32) {
    %c0_i32 = arith.constant 0 : i32
    %c0_i32_0 = arith.constant 0 : i32
    return %c0_i32, %arg1 : i32, i32
  }
  func.func @transform_1(%arg0: i32, %arg1: i32) -> (i32, i32) {
    %c0_i32 = arith.constant 0 : i32
    return %arg0, %arg1 : i32, i32
  }
  func.func @transform_2(%arg0: i32, %arg1: i32) -> (i32, i32) {
    %c0_i32 = arith.constant 0 : i32
    %c0_i32_0 = arith.constant 0 : i32
    return %c0_i32, %arg0 : i32, i32
  }
}

</mosaic_0001>

<llo_original>
// kernel: tpu_custom_call.1
$region0: #{tpu_custom_call.1}
  #allocation0 [shape = 'u32[]', space=smem, size = 0x4, offset = 0x4, fixed_abs, tag = 'smem constant byte address 0x4 - core index']
  #allocation1 [shape = 'u32[144,128]{1,0:T(1,128)}', space=vmem, size = 0x12000, scoped, tag = 'internal scratch']
  #allocation2 [shape = 'f32[8,128]{1,0:T(8,128)}', space=vmem, size = 0x1000, scoped, tag = 'scratch operand']
  %s0 = inlined_call_operand.hbm [shape: f32[8,128], index: 0, kind: input, shape index: {}]
  %s1 = inlined_call_operand.hbm [shape: f32[128,128], index: 1, kind: input, shape index: {}]
  %s2 = inlined_call_operand.hbm [shape: f32[8,128], index: 2, kind: output, shape index: {}]
  %s3 = sld [smem:[#allocation0]]
  $region34: #{tpu_custom_call.1} parent=0
    _
  %s5 = ssub.s32 1, %s3
  %s6 = scalar_select 0, %s5, %s3
  $region1: #{tpu_custom_call.1} parent=0
    #allocation3 [shape = 'u8[4096]{0}', space=vmem, size = 0x1000, scoped, tag = 'input window, operand 0, single buffered']
    #allocation4 [shape = 's32[1]{0}', space=sflag, size = 0x4, scoped, tag = 'scoped memory for tpu_custom_call.1']
    #allocation5 [shape = 's32[1]{0}', space=sflag, size = 0x4, scoped, tag = 'scoped memory for tpu_custom_call.1']
    #allocation6 [shape = 'u8[65536]{0}', space=vmem, size = 0x10000, scoped, tag = 'input window, operand 1, single buffered']
    #allocation7 [shape = 's32[1]{0}', space=sflag, size = 0x4, scoped, tag = 'scoped memory for tpu_custom_call.1']
    #allocation8 [shape = 'u8[4096]{0}', space=vmem, size = 0x1000, scoped, tag = 'output window, operand 0, single buffered']
    %7 = vsyncpa [#allocation4], 0
    %8 = vsyncpa [#allocation7], 0
    %9 = vsyncpa [#allocation5], 0
    // Predicated region
    $region2: #{tpu_custom_call.1} parent=1 // pred_check
      _
    $region3: #{tpu_custom_call.1} parent=1 // pred_check_branch
      %11 = sbr.rel (0) target = $region5
    $region4: #{tpu_custom_call.1} parent=1 // pred_region
      %s13 = ssub.s32 128, 128
      %14 = vsyncadd [#allocation4], %s13
      %s16 = sshll.u32 [#allocation3], 4
      %s17 = int_to_ptr.vmem [resolvable:$true] %s16
      %19 = dma.hbm_to_vmem [thread:$0]  %s0, 128, %s17, [#allocation4]
    $region5: #{tpu_custom_call.1} parent=1 // pred_fallthru
      _
    // Predicated region
    $region6: #{tpu_custom_call.1} parent=1 // pred_check
      _
    $region7: #{tpu_custom_call.1} parent=1 // pred_check_branch
      %21 = sbr.rel (0) target = $region9
    $region8: #{tpu_custom_call.1} parent=1 // pred_region
      %s23 = ssub.s32 2048, 2048
      %24 = vsyncadd [#allocation7], %s23
      %s25 = sshll.u32 [#allocation6], 4
      %s26 = int_to_ptr.vmem [resolvable:$true] %s25
      %31 = dma.hbm_to_vmem [thread:$0]  %s1, 2048, %s26, [#allocation7], 128, 128, 8
    $region9: #{tpu_custom_call.1} parent=1 // pred_fallthru
      _
    // Predicated region
    $region10: #{tpu_custom_call.1} parent=1 // pred_check
      _
    $region11: #{tpu_custom_call.1} parent=1 // pred_check_branch
      %33 = sbr.rel (0) target = $region13
    $region12: #{tpu_custom_call.1} parent=1 // pred_region
      %34 = dma.done [#allocation4], 128
    $region13: #{tpu_custom_call.1} parent=1 // pred_fallthru
      _
    // Predicated region
    $region14: #{tpu_custom_call.1} parent=1 // pred_check
      _
    $region15: #{tpu_custom_call.1} parent=1 // pred_check_branch
      %36 = sbr.rel (0) target = $region17
    $region16: #{tpu_custom_call.1} parent=1 // pred_region
      %37 = dma.done [#allocation7], 2048
    $region17: #{tpu_custom_call.1} parent=1 // pred_fallthru
      _
    %p38 = scmp.eq.s32.totalorder 0, 0
    // Predicated region
    $region18: #{tpu_custom_call.1} parent=1 // pred_check
      %p39 = pneg %p38
    $region19: #{tpu_custom_call.1} parent=1 // pred_check_branch
      %41 = sbr.rel (%p39) target = $region21
    $region20: #{tpu_custom_call.1} parent=1 // pred_region
      %42 = vst [vmem:[#allocation2] sm:$0xff] 0.0
    $region21: #{tpu_custom_call.1} parent=1 // pred_fallthru
      _
    %v43 = vld [vmem:[#allocation2] sm:$0xff]
    %v44 = vld [vmem:[#allocation3] sm:$0xff]
    %v45 = vld [vmem:[#allocation6] sm:$0xff]
    %v46 = vld [vmem:[#allocation6 + $0x8] sm:$0xff]
    %v47 = vld [vmem:[#allocation6 + $0x10] sm:$0xff]
    %v48 = vld [vmem:[#allocation6 + $0x18] sm:$0xff]
    %v49 = vld [vmem:[#allocation6 + $0x20] sm:$0xff]
    %v50 = vld [vmem:[#allocation6 + $0x28] sm:$0xff]
    %v51 = vld [vmem:[#allocation6 + $0x30] sm:$0xff]
    %v52 = vld [vmem:[#allocation6 + $0x38] sm:$0xff]
    %v53 = vld [vmem:[#allocation6 + $0x40] sm:$0xff]
    %v54 = vld [vmem:[#allocation6 + $0x48] sm:$0xff]
    %v55 = vld [vmem:[#allocation6 + $0x50] sm:$0xff]
    %v56 = vld [vmem:[#allocation6 + $0x58] sm:$0xff]
    %v57 = vld [vmem:[#allocation6 + $0x60] sm:$0xff]
    %v58 = vld [vmem:[#allocation6 + $0x68] sm:$0xff]
    %v59 = vld [vmem:[#allocation6 + $0x70] sm:$0xff]
    %v60 = vld [vmem:[#allocation6 + $0x78] sm:$0xff]
    %61 = vmatprep.subr.mxu0 0.0
    %62 = vmatpush1.xpose.msra.mxu0 %v45
    %63 = vmatprep.subr.mxu0 0.0
    %64 = vmatpush1.xpose.msra.mxu0 %v46
    %65 = vmatprep.subr.mxu0 0.0
    %66 = vmatpush1.xpose.msra.mxu0 %v47
    %67 = vmatprep.subr.mxu0 0.0
    %68 = vmatpush1.xpose.msra.mxu0 %v48
    %69 = vmatprep.subr.mxu0 0.0
    %70 = vmatpush1.xpose.msra.mxu0 %v49
    %71 = vmatprep.subr.mxu0 0.0
    %72 = vmatpush1.xpose.msra.mxu0 %v50
    %73 = vmatprep.subr.mxu0 0.0
    %74 = vmatpush1.xpose.msra.mxu0 %v51
    %75 = vmatprep.subr.mxu0 0.0
    %76 = vmatpush1.xpose.msra.mxu0 %v52
    %77 = vmatprep.subr.mxu0 0.0
    %78 = vmatpush1.xpose.msra.mxu0 %v53
    %79 = vmatprep.subr.mxu0 0.0
    %80 = vmatpush1.xpose.msra.mxu0 %v54
    %81 = vmatprep.subr.mxu0 0.0
    %82 = vmatpush1.xpose.msra.mxu0 %v55
    %83 = vmatprep.subr.mxu0 0.0
    %84 = vmatpush1.xpose.msra.mxu0 %v56
    %85 = vmatprep.subr.mxu0 0.0
    %86 = vmatpush1.xpose.msra.mxu0 %v57
    %87 = vmatprep.subr.mxu0 0.0
    %88 = vmatpush1.xpose.msra.mxu0 %v58
    %89 = vmatprep.subr.mxu0 0.0
    %90 = vmatpush1.xpose.msra.mxu0 %v59
    %91 = vmatprep.subr.mxu0 0.0
    %92 = vmatpush1.xpose.msra.mxu0 %v60
    %93 = vmatprep.subr.mxu0 0.0
    %94 = vmatpush1.xpose.msra.mxu0 0.0
    %95 = vmatprep.subr.mxu0 0.0
    %96 = vmatpush1.xpose.msra.mxu0 0.0
    %97 = vmatprep.subr.mxu0 0.0
    %98 = vmatpush1.xpose.msra.mxu0 0.0
    %99 = vmatprep.subr.mxu0 0.0
    %100 = vmatpush1.xpose.msra.mxu0 0.0
    %101 = vmatprep.subr.mxu0 0.0
    %102 = vmatpush1.xpose.msra.mxu0 0.0
    %103 = vmatprep.subr.mxu0 0.0
    %104 = vmatpush1.xpose.msra.mxu0 0.0
    %105 = vmatprep.subr.mxu0 0.0
    %106 = vmatpush1.xpose.msra.mxu0 0.0
    %107 = vmatprep.subr.mxu0 0.0
    %108 = vmatpush1.xpose.msra.mxu0 0.0
    %109 = vmatprep.subr.mxu0 0.0
    %110 = vmatpush1.xpose.msra.mxu0 0.0
    %111 = vmatprep.subr.mxu0 0.0
    %112 = vmatpush1.xpose.msra.mxu0 0.0
    %113 = vmatprep.subr.mxu0 0.0
    %114 = vmatpush1.xpose.msra.mxu0 0.0
    %115 = vmatprep.subr.mxu0 0.0
    %116 = vmatpush1.xpose.msra.mxu0 0.0
    %117 = vmatprep.subr.mxu0 0.0
    %118 = vmatpush1.xpose.msra.mxu0 0.0
    %119 = vmatprep.subr.mxu0 0.0
    %120 = vmatpush1.xpose.msra.mxu0 0.0
    %121 = vmatprep.subr.mxu0 0.0
    %122 = vmatpush1.xpose.msra.mxu0 0.0
    %123 = vmatprep.subr.mxu0 0.0
    %124 = vmatpush1.xpose.msra.mxu0 0.0
    %125 = vmatprep.mubr.f32.mxu0 0.0
    %126 = vmatmul.mubr.f32.gmra.mrb[0].mxu0 %v44
    %v127 = vpop.f32.mrb[0].mxu0
    %v128 = vadd.f32 0.0, %v127
    %v129 = vpop.f32.mrb[0].mxu0
    %130 = vdwg.mxu0
    %v131 = vadd.f32 %v43, %v128
    %132 = vst [vmem:[#allocation2] sm:$0xff] %v131
    // Predicated region
    $region22: #{tpu_custom_call.1} parent=1 // pred_check
      %p133 = pneg %p38
    $region23: #{tpu_custom_call.1} parent=1 // pred_check_branch
      %135 = sbr.rel (%p133) target = $region25
    $region24: #{tpu_custom_call.1} parent=1 // pred_region
      %v136 = vld [vmem:[#allocation2] sm:$0xff]
      %137 = vst [vmem:[#allocation8] sm:$0xff] %v136
    $region25: #{tpu_custom_call.1} parent=1 // pred_fallthru
      _
    // Predicated region
    $region26: #{tpu_custom_call.1} parent=1 // pred_check
      _
    $region27: #{tpu_custom_call.1} parent=1 // pred_check_branch
      %139 = sbr.rel (0) target = $region29
    $region28: #{tpu_custom_call.1} parent=1 // pred_region
      %s141 = ssub.s32 128, 128
      %142 = vsyncadd [#allocation5], %s141
      %s144 = sshll.u32 [#allocation8], 4
      %s145 = int_to_ptr.vmem [resolvable:$true] %s144
      %147 = dma.vmem_to_hbm [thread:$0]  %s145, 128, %s2, [#allocation5]
    $region29: #{tpu_custom_call.1} parent=1 // pred_fallthru
      _
    // Predicated region
    $region30: #{tpu_custom_call.1} parent=1 // pred_check
      _
    $region31: #{tpu_custom_call.1} parent=1 // pred_check_branch
      %149 = sbr.rel (0) target = $region33
    $region32: #{tpu_custom_call.1} parent=1 // pred_region
      %150 = dma.done [#allocation5], 128
    $region33: #{tpu_custom_call.1} parent=1 // pred_fallthru
      _
    %151 = vsyncpa [#allocation4], 1
    %152 = vsyncpa [#allocation7], 1
    %153 = vsyncpa [#allocation5], 1

</llo_original>
